<compile_context>
chip_gen: v5e
topology: v5e:2x2
jax: 0.10.0
libtpu: 0.0.40
codegen_flags: <defaults>
</compile_context>

<pallas_src>
import functools

import jax
import jax.numpy as jnp
from jax.experimental import pallas as pl
from jax.experimental.pallas import tpu as pltpu


def _cdiv(a, b):
    return -(-a // b)


def _round_up(a, b):
    return _cdiv(a, b) * b


def _kl_kernel(s_ref, t_ref, out_ref, *, inv_temp, hw, tile_hw, tiles_per_split,
               need_mask, class_idx):
    """One (TILE_N, C, TILE_HW) logit tile of student / teacher.

    out_ref: (TILE_N, 1, 1, 1) f32 per-(image, spatial-split) KL partial sum.
    It is resident across the innermost ("arbitrary") grid axis and is
    accumulated in place (no separate sublane-padded VMEM accumulator).
    """
    t_idx = pl.program_id(2)

    @pl.when(t_idx == 0)
    def _():
        out_ref[...] = jnp.zeros_like(out_ref)

    s = s_ref[...].astype(jnp.float32) * inv_temp             # (TN, C, THW)

    if class_idx is None:
        t_raw = t_ref[...]
    else:
        # Fused teacher class selection: static sublane slices of the VMEM tile
        # concatenated along the class axis (no extra HBM gather pass).
        t_raw = jnp.concatenate([t_ref[:, k:k + 1, :] for k in class_idx], axis=1)
    t = t_raw.astype(jnp.float32) * inv_temp                   # (TN, C, THW)

    # Per-location softmax statistics; reductions are over the small class axis
    # which sits on the sublane dimension.
    s_shift = s - jnp.max(s, axis=1, keepdims=True)
    t_shift = t - jnp.max(t, axis=1, keepdims=True)

    s_sum = jnp.sum(jnp.exp(s_shift), axis=1, keepdims=True)   # (TN, 1, THW)
    t_exp = jnp.exp(t_shift)
    t_sum = jnp.sum(t_exp, axis=1, keepdims=True)               # (TN, 1, THW)
    num = jnp.sum(t_exp * (t_shift - s_shift), axis=1, keepdims=True)

    # KL summed over classes (exact divide to stay within tolerance).
    kl = num / t_sum + (jnp.log(s_sum) - jnp.log(t_sum))        # (TN, 1, THW)

    if need_mask:
        # Mask only the final kl vector (not s and t): garbage / NaN / Inf in
        # out-of-range lanes is safe because where() selects, never combines,
        # and valid lanes never read out-of-range data (all ops are lane-wise).
        j = pl.program_id(1) * tiles_per_split + t_idx
        col = jax.lax.broadcasted_iota(jnp.int32, kl.shape, 2) + j * tile_hw
        kl = jnp.where(col < hw, kl, 0.0)

    psum = jnp.sum(kl, axis=2, keepdims=True)                   # (TN, 1, 1)
    out_ref[...] += psum[:, :, :, None]                         # (TN, 1, 1, 1)


def _choose_tiling(n_img, c_s, c_t, hw, s_itemsize, t_itemsize, budget_bytes):
    """Pick (tile_n, tile_hw, splits, tiles_per_split, need_mask).

    budget_bytes is a per-step VMEM working-set budget: 2 pipeline buffers of
    both input blocks plus ~6 live f32 (C, tile_hw) elementwise temporaries
    (the f32 term keeps the estimate correct for bf16 inputs as well).
    """
    lane = 128
    hw_pad = _round_up(hw, lane)
    c_eff = max(c_s, c_t)
    per_col = 2 * (c_s * s_itemsize + c_t * t_itemsize) + 6 * c_eff * 4

    if hw_pad * per_col <= budget_bytes:
        # Small-spatial regime: one full-extent spatial tile; batch several
        # images per grid step to amortise per-step / per-launch overhead.
        tile_n = max(1, min(n_img, budget_bytes // (hw_pad * per_col)))
        return tile_n, hw, 1, 1, False

    # Large-spatial regime: one image per step, lane-aligned spatial tiles.
    tile_hw = max(lane, (budget_bytes // per_col) // lane * lane)
    num_tiles = _cdiv(hw, tile_hw)
    # Prefer an even tile count so the spatial axis splits exactly into two
    # "parallel" halves (keeps both v7x TensorCores busy even at batch 1).
    if num_tiles >= 2 and num_tiles % 2 == 1:
        cand = _round_up(_cdiv(hw, num_tiles + 1), lane)
        if _cdiv(hw, cand) % 2 == 0:
            tile_hw = cand
            num_tiles = _cdiv(hw, cand)
    if num_tiles >= 2 and num_tiles % 2 == 0:
        splits, tiles_per_split = 2, num_tiles // 2
    else:
        splits, tiles_per_split = 1, num_tiles
    need_mask = (hw % tile_hw) != 0
    return 1, tile_hw, splits, tiles_per_split, need_mask


def _kl_sum_per_image(s3, t3, class_idx, temp, vmem_budget_bytes):
    """Per-image sum of KL(student || teacher soft targets) over classes & space.

    s3: (N, C, HW) student logits; t3: (N, C_T, HW) teacher logits (NCHW with
    spatial dims flattened, no transpose).  Returns f32 array of shape (N,).
    """
    n_img, c_s, hw = s3.shape
    c_t = t3.shape[1]
    if class_idx is None:
        assert c_s == c_t
    else:
        assert len(class_idx) == c_s

    tile_n, tile_hw, splits, tps, need_mask = _choose_tiling(
        n_img, c_s, c_t, hw,
        jnp.dtype(s3.dtype).itemsize, jnp.dtype(t3.dtype).itemsize,
        vmem_budget_bytes)

    kernel = functools.partial(
        _kl_kernel,
        inv_temp=1.0 / float(temp),
        hw=hw,
        tile_hw=tile_hw,
        tiles_per_split=tps,
        need_mask=need_mask,
        class_idx=class_idx,
    )

    out = pl.pallas_call(
        kernel,
        out_shape=jax.ShapeDtypeStruct((n_img, splits, 1, 1), jnp.float32),
        grid_spec=pltpu.PrefetchScalarGridSpec(
            num_scalar_prefetch=0,
            grid=(pl.cdiv(n_img, tile_n), splits, tps),
            in_specs=[
                pl.BlockSpec((tile_n, c_s, tile_hw),
                             lambda i, s, t: (i, 0, s * tps + t)),
                pl.BlockSpec((tile_n, c_t, tile_hw),
                             lambda i, s, t: (i, 0, s * tps + t)),
            ],
            out_specs=pl.BlockSpec((tile_n, 1, 1, 1),
                                   lambda i, s, t: (i, s, 0, 0)),
        ),
        compiler_params=pltpu.CompilerParams(
            # batch blocks and spatial splits are parallel (v7x 2-TC sharding);
            # the innermost axis carries the resident-output accumulation.
            dimension_semantics=("parallel", "parallel", "arbitrary"),
            vmem_limit_bytes=32 * 1024 * 1024,
        ),
    )(s3, t3)
    return jnp.sum(out, axis=(1, 2, 3))            # (N,)


def response_loss(s_preds, t_preds, teacher_class_idx, temp=4.0,
                  vmem_budget_bytes=12 * 1024 * 1024,
                  stack_bytes_limit=4 * 1024 * 1024):
    """JAX/Pallas equivalent of ResponseLoss.forward.

    Matches mean over entries of
      F.kl_div(log_softmax(s/T), softmax(t/T), reduction='batchmean') * T**2,
    with teacher class selection when the channel counts differ.
    """
    assert len(s_preds) == len(t_preds) and len(s_preds) > 0
    idx = (None if teacher_class_idx is None
           else tuple(int(i) for i in teacher_class_idx))

    # Group identically-shaped (s, t) pairs; small groups are stacked along the
    # batch axis so one pallas_call (and its launch/grid-step overhead) is
    # shared across list entries.
    groups = {}
    for s, t in zip(s_preds, t_preds):
        sel = idx if s.shape[1] != t.shape[1] else None
        key = (s.shape, t.shape, str(s.dtype), str(t.dtype), sel)
        groups.setdefault(key, []).append((s, t))

    total = jnp.float32(0.0)
    for (s_shape, t_shape, _, _, sel), pairs in groups.items():
        n, c, h, w = s_shape
        hw = h * w
        c_t = t_shape[1]
        entry_bytes = n * c * hw * jnp.dtype(pairs[0][0].dtype).itemsize
        if len(pairs) > 1 and entry_bytes <= stack_bytes_limit:
            # Free reshapes + one small concat; batchmean still divides by the
            # per-entry batch size n.
            s3 = jnp.concatenate([s.reshape(n, c, hw) for s, _ in pairs], axis=0)
            t3 = jnp.concatenate([t.reshape(n, c_t, hw) for _, t in pairs], axis=0)
            per_img = _kl_sum_per_image(s3, t3, sel, temp, vmem_budget_bytes)
            total = total + jnp.sum(per_img) / n
        else:
            for s, t in pairs:
                per_img = _kl_sum_per_image(s.reshape(n, c, hw),
                                            t.reshape(n, c_t, hw),
                                            sel, temp, vmem_budget_bytes)
                total = total + jnp.sum(per_img) / n
    return total * (temp ** 2) / len(s_preds)


def _response_loss_ref(s_preds, t_preds, teacher_class_idx, temp=4.0):
    """Pure-JAX reference for verification."""
    idx = jnp.asarray(teacher_class_idx, dtype=jnp.int32)
    total = jnp.float32(0.0)
    for s, t in zip(s_preds, t_preds):
        if s.shape[1] != t.shape[1]:
            t = jnp.take(t, idx, axis=1)
        n = s.shape[0]
        s_logp = jax.nn.log_softmax(s.astype(jnp.float32) / temp, axis=1)
        t_prob = jax.nn.softmax(t.astype(jnp.float32) / temp, axis=1)
        t_logp = jax.nn.log_softmax(t.astype(jnp.float32) / temp, axis=1)
        kl = jnp.sum(t_prob * (t_logp - s_logp))
        total = total + kl / n * (temp ** 2)
    return total / len(s_preds)


if __name__ == "__main__":
    key = jax.random.PRNGKey(0)
    ks = jax.random.split(key, 10)
    temp = 4.0
    teacher_class_idx = [0, 2, 3, 5]

    # Test 1: small feature maps.  Entries 0 and 2 share shapes (exercises the
    # stacked-entries path); entry 1 needs in-kernel teacher class selection
    # (C_T=6 -> C=4); the whole spatial extent fits one tile (TILE_N batching).
    B, C_S, C_T, H, W = 2, 4, 6, 16, 16
    s_preds = [jax.random.normal(ks[0], (B, C_S, H, W), dtype=jnp.float32),
               jax.random.normal(ks[1], (B, C_S, H, W), dtype=jnp.float32),
               jax.random.normal(ks[2], (B, C_S, H, W), dtype=jnp.float32)]
    t_preds = [jax.random.normal(ks[3], (B, C_S, H, W), dtype=jnp.float32),
               jax.random.normal(ks[4], (B, C_T, H, W), dtype=jnp.float32),
               jax.random.normal(ks[5], (B, C_S, H, W), dtype=jnp.float32)]
    out1 = jax.block_until_ready(
        response_loss(s_preds, t_preds, teacher_class_idx, temp=temp))
    ref1 = jax.block_until_ready(
        _response_loss_ref(s_preds, t_preds, teacher_class_idx, temp=temp))
    assert jnp.allclose(out1, ref1, rtol=1e-4, atol=1e-5), (out1, ref1)

    # Test 2: force the multi-tile / spatial-split / remainder-mask path with a
    # tiny VMEM budget while keeping the tensors small (H=W=30 -> HW=900).
    H2 = W2 = 30
    s2 = [jax.random.normal(ks[6], (B, C_S, H2, W2), dtype=jnp.float32),
          jax.random.normal(ks[7], (B, C_S, H2, W2), dtype=jnp.float32)]
    t2 = [jax.random.normal(ks[8], (B, C_S, H2, W2), dtype=jnp.float32),
          jax.random.normal(ks[9], (B, C_T, H2, W2), dtype=jnp.float32)]
    out2 = jax.block_until_ready(
        response_loss(s2, t2, teacher_class_idx, temp=temp,
                      vmem_budget_bytes=64 * 1024))
    ref2 = jax.block_until_ready(
        _response_loss_ref(s2, t2, teacher_class_idx, temp=temp))
    assert jnp.allclose(out2, ref2, rtol=1e-4, atol=1e-5), (out2, ref2)

    print("KERNEL_OK")
</pallas_src>

<mosaic_0001>
module attributes {stable_mosaic.version = 11 : i64} {
  func.func @_kl_kernel(%arg0: i32, %arg1: i32, %arg2: i32, %arg3: memref<4x4x256xf32, #tpu.memory_space<vmem>>, %arg4: memref<4x4x256xf32, #tpu.memory_space<vmem>>, %arg5: memref<4x1x1x1xf32, #tpu.memory_space<vmem>>) attributes {dimension_semantics = [#tpu.dimension_semantics<parallel>, #tpu.dimension_semantics<parallel>, #tpu.dimension_semantics<arbitrary>], iteration_bounds = array<i64: 1, 1, 1>, scalar_prefetch = 0 : i64, scratch_operands = 0 : i64, tpu.core_type = #tpu.core_type<tc>, window_params = [{transform_indices = @transform_0, window_bounds = array<i64: 4, 4, 256>}, {transform_indices = @transform_1, window_bounds = array<i64: 4, 4, 256>}, {transform_indices = @transform_2, window_bounds = array<i64: 4, 1, 1, 1>}]} {
    %c0_i32 = arith.constant 0 : i32
    %0 = arith.cmpi eq, %arg2, %c0_i32 : i32
    %1 = arith.extui %0 : i1 to i32
    %c0_i32_0 = arith.constant 0 : i32
    %2 = arith.cmpi ne, %1, %c0_i32_0 : i32
    scf.if %2 {
      %cst_21 = arith.constant 0.000000e+00 : f32
      %38 = vector.broadcast %cst_21 : f32 to vector<4x1x1x1xf32>
      %c0_22 = arith.constant 0 : index
      %c0_23 = arith.constant 0 : index
      %c0_24 = arith.constant 0 : index
      %c0_25 = arith.constant 0 : index
      %39 = vector.load %arg5[%c0_22, %c0_23, %c0_24, %c0_25] : memref<4x1x1x1xf32, #tpu.memory_space<vmem>>, vector<4x1x1x1xf32>
      tpu.vector_store %arg5[%c0_22, %c0_23, %c0_24, %c0_25], %38 {strides = array<i32>} : memref<4x1x1x1xf32, #tpu.memory_space<vmem>>, vector<4x1x1x1xf32>,
    } else {
    }
    %c0 = arith.constant 0 : index
    %c0_1 = arith.constant 0 : index
    %c0_2 = arith.constant 0 : index
    %3 = vector.load %arg3[%c0, %c0_1, %c0_2] : memref<4x4x256xf32, #tpu.memory_space<vmem>>, vector<4x4x256xf32>
    %cst = arith.constant 2.500000e-01 : f32
    %4 = vector.broadcast %cst : f32 to vector<4x4x256xf32>
    %5 = arith.mulf %3, %4 : vector<4x4x256xf32>
    %c0_3 = arith.constant 0 : index
    %c0_4 = arith.constant 0 : index
    %c0_5 = arith.constant 0 : index
    %6 = vector.load %arg4[%c0_3, %c0_4, %c0_5] : memref<4x4x256xf32, #tpu.memory_space<vmem>>, vector<4x4x256xf32>
    %cst_6 = arith.constant 2.500000e-01 : f32
    %7 = vector.broadcast %cst_6 : f32 to vector<4x4x256xf32>
    %8 = arith.mulf %6, %7 : vector<4x4x256xf32>
    %cst_7 = arith.constant dense<0xFF800000> : vector<4x256xf32>
    %9 = vector.multi_reduction <maximumf>, %5, %cst_7 [1] : vector<4x4x256xf32> to vector<4x256xf32>
    %10 = vector.shape_cast %9 : vector<4x256xf32> to vector<4x1x256xf32>
    %11 = vector.broadcast %10 : vector<4x1x256xf32> to vector<4x4x256xf32>
    %12 = arith.subf %5, %11 : vector<4x4x256xf32>
    %cst_8 = arith.constant dense<0xFF800000> : vector<4x256xf32>
    %13 = vector.multi_reduction <maximumf>, %8, %cst_8 [1] : vector<4x4x256xf32> to vector<4x256xf32>
    %14 = vector.shape_cast %13 : vector<4x256xf32> to vector<4x1x256xf32>
    %15 = vector.broadcast %14 : vector<4x1x256xf32> to vector<4x4x256xf32>
    %16 = arith.subf %8, %15 : vector<4x4x256xf32>
    %17 = math.exp %12 : vector<4x4x256xf32>
    %cst_9 = arith.constant dense<0.000000e+00> : vector<4x256xf32>
    %18 = vector.multi_reduction <add>, %17, %cst_9 [1] : vector<4x4x256xf32> to vector<4x256xf32>
    %19 = vector.shape_cast %18 : vector<4x256xf32> to vector<4x1x256xf32>
    %20 = math.exp %16 : vector<4x4x256xf32>
    %cst_10 = arith.constant dense<0.000000e+00> : vector<4x256xf32>
    %21 = vector.multi_reduction <add>, %20, %cst_10 [1] : vector<4x4x256xf32> to vector<4x256xf32>
    %22 = vector.shape_cast %21 : vector<4x256xf32> to vector<4x1x256xf32>
    %23 = arith.subf %16, %12 : vector<4x4x256xf32>
    %24 = arith.mulf %20, %23 : vector<4x4x256xf32>
    %cst_11 = arith.constant dense<0.000000e+00> : vector<4x256xf32>
    %25 = vector.multi_reduction <add>, %24, %cst_11 [1] : vector<4x4x256xf32> to vector<4x256xf32>
    %26 = vector.shape_cast %25 : vector<4x256xf32> to vector<4x1x256xf32>
    %27 = arith.divf %26, %22 : vector<4x1x256xf32>
    %28 = math.log %19 : vector<4x1x256xf32>
    %29 = math.log %22 : vector<4x1x256xf32>
    %30 = arith.subf %28, %29 : vector<4x1x256xf32>
    %31 = arith.addf %27, %30 : vector<4x1x256xf32>
    %cst_12 = arith.constant dense<0.000000e+00> : vector<4x1xf32>
    %32 = vector.multi_reduction <add>, %31, %cst_12 [2] : vector<4x1x256xf32> to vector<4x1xf32>
    %33 = vector.shape_cast %32 : vector<4x1xf32> to vector<4x1x1xf32>
    %c0_13 = arith.constant 0 : index
    %c0_14 = arith.constant 0 : index
    %c0_15 = arith.constant 0 : index
    %c0_16 = arith.constant 0 : index
    %34 = vector.load %arg5[%c0_13, %c0_14, %c0_15, %c0_16] : memref<4x1x1x1xf32, #tpu.memory_space<vmem>>, vector<4x1x1x1xf32>
    %35 = vector.shape_cast %33 : vector<4x1x1xf32> to vector<4x1x1x1xf32>
    %36 = arith.addf %34, %35 : vector<4x1x1x1xf32>
    %c0_17 = arith.constant 0 : index
    %c0_18 = arith.constant 0 : index
    %c0_19 = arith.constant 0 : index
    %c0_20 = arith.constant 0 : index
    %37 = vector.load %arg5[%c0_17, %c0_18, %c0_19, %c0_20] : memref<4x1x1x1xf32, #tpu.memory_space<vmem>>, vector<4x1x1x1xf32>
    tpu.vector_store %arg5[%c0_17, %c0_18, %c0_19, %c0_20], %36 {strides = array<i32>} : memref<4x1x1x1xf32, #tpu.memory_space<vmem>>, vector<4x1x1x1xf32>,
    return
  }
  func.func @transform_0(%arg0: i32, %arg1: i32, %arg2: i32) -> (i32, i32, i32) {
    %c1_i32 = arith.constant 1 : i32
    %0 = arith.muli %arg1, %c1_i32 : i32
    %1 = arith.addi %0, %arg2 : i32
    %c0_i32 = arith.constant 0 : i32
    %c0_i32_0 = arith.constant 0 : i32
    return %arg0, %c0_i32, %1 : i32, i32, i32
  }
  func.func @transform_1(%arg0: i32, %arg1: i32, %arg2: i32) -> (i32, i32, i32) {
    %c1_i32 = arith.constant 1 : i32
    %0 = arith.muli %arg1, %c1_i32 : i32
    %1 = arith.addi %0, %arg2 : i32
    %c0_i32 = arith.constant 0 : i32
    %c0_i32_0 = arith.constant 0 : i32
    return %arg0, %c0_i32, %1 : i32, i32, i32
  }
  func.func @transform_2(%arg0: i32, %arg1: i32, %arg2: i32) -> (i32, i32, i32, i32) {
    %c0_i32 = arith.constant 0 : i32
    %c0_i32_0 = arith.constant 0 : i32
    %c0_i32_1 = arith.constant 0 : i32
    return %arg0, %arg1, %c0_i32, %c0_i32_0 : i32, i32, i32, i32
  }
}

</mosaic_0001>

<llo_original>
// kernel: tpu_custom_call.1
$region0: #{tpu_custom_call.1}
  #allocation0 [shape = 'u32[]', space=smem, size = 0x4, offset = 0x4, fixed_abs, tag = 'smem constant byte address 0x4 - core index']
  #allocation1 [shape = 'u32[72,128]{1,0:T(1,128)}', space=vmem, size = 0x9000, scoped, tag = 'internal scratch']
  %s0 = inlined_call_operand.hbm [shape: f32[4,4,256], index: 0, kind: input, shape index: {}]
  %s1 = inlined_call_operand.hbm [shape: f32[4,4,256], index: 1, kind: input, shape index: {}]
  %s2 = inlined_call_operand.vmem [shape: f32[4,1,1,1], index: 2, kind: output, shape index: {}]
  %s3 = sld [smem:[#allocation0]]
  $region30: #{tpu_custom_call.1} parent=0
    _
  %s5 = ssub.s32 1, %s3
  %s6 = scalar_select 0, %s5, %s3
  $region1: #{tpu_custom_call.1} parent=0
    #allocation2 [shape = 'u8[16384]{0}', space=vmem, size = 0x4000, scoped, tag = 'input window, operand 0, single buffered']
    #allocation3 [shape = 's32[1]{0}', space=sflag, size = 0x4, scoped, tag = 'scoped memory for tpu_custom_call.1']
    #allocation4 [shape = 'u8[16384]{0}', space=vmem, size = 0x4000, scoped, tag = 'input window, operand 1, single buffered']
    #allocation5 [shape = 's32[1]{0}', space=sflag, size = 0x4, scoped, tag = 'scoped memory for tpu_custom_call.1']
    %7 = vsyncpa [#allocation3], 0
    %8 = vsyncpa [#allocation5], 0
    // Predicated region
    $region2: #{tpu_custom_call.1} parent=1 // pred_check
      _
    $region3: #{tpu_custom_call.1} parent=1 // pred_check_branch
      %10 = sbr.rel (0) target = $region5
    $region4: #{tpu_custom_call.1} parent=1 // pred_region
      %s11 = sadd.s32 0, 0
      %s12 = smul.u32 2, %s11
      %14 = vsyncadd [#allocation3], 0
      %s15 = smul.addr %s12, 4
      %s16 = scalar_lea.hbm %s0, %s15
      %s17 = sshll.u32 %s16, 4
      %s18 = int_to_ptr.hbm [resolvable:$true] %s17
      %s19 = sshll.u32 [#allocation2], 4
      %s20 = int_to_ptr.vmem [resolvable:$true] %s19
      %25 = dma.hbm_to_vmem [thread:$0]  %s18, 512, %s20, [#allocation3], 128, 128, 8
    $region5: #{tpu_custom_call.1} parent=1 // pred_fallthru
      _
    // Predicated region
    $region6: #{tpu_custom_call.1} parent=1 // pred_check
      _
    $region7: #{tpu_custom_call.1} parent=1 // pred_check_branch
      %27 = sbr.rel (0) target = $region9
    $region8: #{tpu_custom_call.1} parent=1 // pred_region
      %s28 = sadd.s32 0, 0
      %s29 = smul.u32 2, %s28
      %31 = vsyncadd [#allocation5], 0
      %s32 = smul.addr %s29, 4
      %s33 = scalar_lea.hbm %s1, %s32
      %s34 = sshll.u32 %s33, 4
      %s35 = int_to_ptr.hbm [resolvable:$true] %s34
      %s36 = sshll.u32 [#allocation4], 4
      %s37 = int_to_ptr.vmem [resolvable:$true] %s36
      %42 = dma.hbm_to_vmem [thread:$0]  %s35, 512, %s37, [#allocation5], 128, 128, 8
    $region9: #{tpu_custom_call.1} parent=1 // pred_fallthru
      _
    // Predicated region
    $region10: #{tpu_custom_call.1} parent=1 // pred_check
      _
    $region11: #{tpu_custom_call.1} parent=1 // pred_check_branch
      %44 = sbr.rel (0) target = $region13
    $region12: #{tpu_custom_call.1} parent=1 // pred_region
      %46 = dma.done [#allocation3], 512
    $region13: #{tpu_custom_call.1} parent=1 // pred_fallthru
      _
    // Predicated region
    $region14: #{tpu_custom_call.1} parent=1 // pred_check
      _
    $region15: #{tpu_custom_call.1} parent=1 // pred_check_branch
      %48 = sbr.rel (0) target = $region17
    $region16: #{tpu_custom_call.1} parent=1 // pred_region
      %50 = dma.done [#allocation5], 512
    $region17: #{tpu_custom_call.1} parent=1 // pred_fallthru
      _
    %s51 = sadd.s32 0, 0
    %s52 = smul.u32 2, %s51
    %s53 = sadd.s32 0, 0
    %s54 = smul.u32 2, %s53
    %p55 = scmp.eq.s32.totalorder 0, 0
    // Predicated region
    $region18: #{tpu_custom_call.1} parent=1 // pred_check
      %p56 = pneg %p55
    $region19: #{tpu_custom_call.1} parent=1 // pred_check_branch
      %58 = sbr.rel (%p56) target = $region21
    $region20: #{tpu_custom_call.1} parent=1 // pred_region
      %vm59 = vcmask 0
      %60 = vst.msk [vmem:[%s2] sm:$0x1] %vm59, 0.0
      %61 = vst.msk [vmem:[%s2 + $0x1] sm:$0x1] %vm59, 0.0
      %62 = vst.msk [vmem:[%s2 + $0x2] sm:$0x1] %vm59, 0.0
      %63 = vst.msk [vmem:[%s2 + $0x3] sm:$0x1] %vm59, 0.0
    $region21: #{tpu_custom_call.1} parent=1 // pred_fallthru
      _
    %v64 = vld [vmem:[#allocation2] sm:$0xff]
    %v65 = vld [vmem:[#allocation2 + $0x8] sm:$0xff]
    %v66 = vld [vmem:[#allocation2 + $0x10] sm:$0xff]
    %v67 = vld [vmem:[#allocation2 + $0x18] sm:$0xff]
    %v68 = vmul.f32 %v64, 0.25
    %v69 = vmul.f32 %v65, 0.25
    %v70 = vmul.f32 %v66, 0.25
    %v71 = vmul.f32 %v67, 0.25
    %v72 = vld [vmem:[#allocation4] sm:$0xff]
    %v73 = vld [vmem:[#allocation4 + $0x8] sm:$0xff]
    %v74 = vld [vmem:[#allocation4 + $0x10] sm:$0xff]
    %v75 = vld [vmem:[#allocation4 + $0x18] sm:$0xff]
    %v76 = vmul.f32 %v72, 0.25
    %v77 = vmul.f32 %v73, 0.25
    %v78 = vmul.f32 %v74, 0.25
    %v79 = vmul.f32 %v75, 0.25
    %84 = vst [vmem:[#allocation1] ss:$2 sm:$0xff] %v68
    %v85 = vld.sshfl [vmem:[#allocation1] sm:$0xff pattern:$0x75316420]
    %v86 = vld.sshfl [vmem:[#allocation1 + $0x8] sm:$0xff pattern:$0x75316420]
    %s87 = scalar_lea.vmem [#allocation1], 16
    %88 = vst [vmem:[%s87] ss:$2 sm:$0xff] %v69
    %v89 = vld.sshfl [vmem:[#allocation1 + $0x10] sm:$0xff pattern:$0x75316420]
    %v90 = vld.sshfl [vmem:[#allocation1 + $0x18] sm:$0xff pattern:$0x75316420]
    %s91 = scalar_lea.vmem [#allocation1], 32
    %92 = vst [vmem:[%s91] ss:$2 sm:$0xff] %v70
    %v93 = vld.sshfl [vmem:[#allocation1 + $0x20] sm:$0xff pattern:$0x75316420]
    %v94 = vld.sshfl [vmem:[#allocation1 + $0x28] sm:$0xff pattern:$0x75316420]
    %s95 = scalar_lea.vmem [#allocation1], 48
    %96 = vst [vmem:[%s95] ss:$2 sm:$0xff] %v71
    %v97 = vld.sshfl [vmem:[#allocation1 + $0x30] sm:$0xff pattern:$0x75316420]
    %v98 = vld.sshfl [vmem:[#allocation1 + $0x38] sm:$0xff pattern:$0x75316420]
    %vm107 = vcmask 1043456
    %v108 = vsel %vm107, %v85, -inf
    %v109 = vrot.slane %v108, 4
    %v110 = vmax.f32 %v108, %v109
    %v111 = vrot.slane %v110, 2
    %v112 = vmax.f32 %v110, %v111
    %v113 = vrot.slane %v112, 1
    %v114 = vmax.f32 %v112, %v113
    %v115 = vsel %vm107, %v86, -inf
    %v116 = vrot.slane %v115, 4
    %v117 = vmax.f32 %v115, %v116
    %v118 = vrot.slane %v117, 2
    %v119 = vmax.f32 %v117, %v118
    %v120 = vrot.slane %v119, 1
    %v121 = vmax.f32 %v119, %v120
    %v122 = vsel %vm107, %v89, -inf
    %v123 = vrot.slane %v122, 4
    %v124 = vmax.f32 %v122, %v123
    %v125 = vrot.slane %v124, 2
    %v126 = vmax.f32 %v124, %v125
    %v127 = vrot.slane %v126, 1
    %v128 = vmax.f32 %v126, %v127
    %v129 = vsel %vm107, %v90, -inf
    %v130 = vrot.slane %v129, 4
    %v131 = vmax.f32 %v129, %v130
    %v132 = vrot.slane %v131, 2
    %v133 = vmax.f32 %v131, %v132
    %v134 = vrot.slane %v133, 1
    %v135 = vmax.f32 %v133, %v134
    %v136 = vsel %vm107, %v93, -inf
    %v137 = vrot.slane %v136, 4
    %v138 = vmax.f32 %v136, %v137
    %v139 = vrot.slane %v138, 2
    %v140 = vmax.f32 %v138, %v139
    %v141 = vrot.slane %v140, 1
    %v142 = vmax.f32 %v140, %v141
    %v143 = vsel %vm107, %v94, -inf
    %v144 = vrot.slane %v143, 4
    %v145 = vmax.f32 %v143, %v144
    %v146 = vrot.slane %v145, 2
    %v147 = vmax.f32 %v145, %v146
    %v148 = vrot.slane %v147, 1
    %v149 = vmax.f32 %v147, %v148
    %v150 = vsel %vm107, %v97, -inf
    %v151 = vrot.slane %v150, 4
    %v152 = vmax.f32 %v150, %v151
    %v153 = vrot.slane %v152, 2
    %v154 = vmax.f32 %v152, %v153
    %v155 = vrot.slane %v154, 1
    %v156 = vmax.f32 %v154, %v155
    %v157 = vsel %vm107, %v98, -inf
    %v158 = vrot.slane %v157, 4
    %v159 = vmax.f32 %v157, %v158
    %v160 = vrot.slane %v159, 2
    %v161 = vmax.f32 %v159, %v160
    %v162 = vrot.slane %v161, 1
    %v163 = vmax.f32 %v161, %v162
    %v172 = vrot.slane %v121, 4
    %v173 = vrot.slane %v135, 4
    %v174 = vrot.slane %v149, 4
    %v175 = vrot.slane %v163, 4
    %v176 = vsel %vm107, %v114, %v172
    %v177 = vsel %vm107, %v128, %v173
    %v178 = vsel %vm107, %v142, %v174
    %v179 = vsel %vm107, %v156, %v175
    %v184 = vsub.f32 %v68, %v176
    %v185 = vsub.f32 %v69, %v177
    %v186 = vsub.f32 %v70, %v178
    %v187 = vsub.f32 %v71, %v179
    %192 = vst [vmem:[#allocation1] ss:$2 sm:$0xff] %v76
    %v193 = vld.sshfl [vmem:[#allocation1] sm:$0xff pattern:$0x75316420]
    %v194 = vld.sshfl [vmem:[#allocation1 + $0x8] sm:$0xff pattern:$0x75316420]
    %s195 = scalar_lea.vmem [#allocation1], 16
    %196 = vst [vmem:[%s195] ss:$2 sm:$0xff] %v77
    %v197 = vld.sshfl [vmem:[#allocation1 + $0x10] sm:$0xff pattern:$0x75316420]
    %v198 = vld.sshfl [vmem:[#allocation1 + $0x18] sm:$0xff pattern:$0x75316420]
    %s199 = scalar_lea.vmem [#allocation1], 32
    %200 = vst [vmem:[%s199] ss:$2 sm:$0xff] %v78
    %v201 = vld.sshfl [vmem:[#allocation1 + $0x20] sm:$0xff pattern:$0x75316420]
    %v202 = vld.sshfl [vmem:[#allocation1 + $0x28] sm:$0xff pattern:$0x75316420]
    %s203 = scalar_lea.vmem [#allocation1], 48
    %204 = vst [vmem:[%s203] ss:$2 sm:$0xff] %v79
    %v205 = vld.sshfl [vmem:[#allocation1 + $0x30] sm:$0xff pattern:$0x75316420]
    %v206 = vld.sshfl [vmem:[#allocation1 + $0x38] sm:$0xff pattern:$0x75316420]
    %v215 = vsel %vm107, %v193, -inf
    %v216 = vrot.slane %v215, 4
    %v217 = vmax.f32 %v215, %v216
    %v218 = vrot.slane %v217, 2
    %v219 = vmax.f32 %v217, %v218
    %v220 = vrot.slane %v219, 1
    %v221 = vmax.f32 %v219, %v220
    %v222 = vsel %vm107, %v194, -inf
    %v223 = vrot.slane %v222, 4
    %v224 = vmax.f32 %v222, %v223
    %v225 = vrot.slane %v224, 2
    %v226 = vmax.f32 %v224, %v225
    %v227 = vrot.slane %v226, 1
    %v228 = vmax.f32 %v226, %v227
    %v229 = vsel %vm107, %v197, -inf
    %v230 = vrot.slane %v229, 4
    %v231 = vmax.f32 %v229, %v230
    %v232 = vrot.slane %v231, 2
    %v233 = vmax.f32 %v231, %v232
    %v234 = vrot.slane %v233, 1
    %v235 = vmax.f32 %v233, %v234
    %v236 = vsel %vm107, %v198, -inf
    %v237 = vrot.slane %v236, 4
    %v238 = vmax.f32 %v236, %v237
    %v239 = vrot.slane %v238, 2
    %v240 = vmax.f32 %v238, %v239
    %v241 = vrot.slane %v240, 1
    %v242 = vmax.f32 %v240, %v241
    %v243 = vsel %vm107, %v201, -inf
    %v244 = vrot.slane %v243, 4
    %v245 = vmax.f32 %v243, %v244
    %v246 = vrot.slane %v245, 2
    %v247 = vmax.f32 %v245, %v246
    %v248 = vrot.slane %v247, 1
    %v249 = vmax.f32 %v247, %v248
    %v250 = vsel %vm107, %v202, -inf
    %v251 = vrot.slane %v250, 4
    %v252 = vmax.f32 %v250, %v251
    %v253 = vrot.slane %v252, 2
    %v254 = vmax.f32 %v252, %v253
    %v255 = vrot.slane %v254, 1
    %v256 = vmax.f32 %v254, %v255
    %v257 = vsel %vm107, %v205, -inf
    %v258 = vrot.slane %v257, 4
    %v259 = vmax.f32 %v257, %v258
    %v260 = vrot.slane %v259, 2
    %v261 = vmax.f32 %v259, %v260
    %v262 = vrot.slane %v261, 1
    %v263 = vmax.f32 %v261, %v262
    %v264 = vsel %vm107, %v206, -inf
    %v265 = vrot.slane %v264, 4
    %v266 = vmax.f32 %v264, %v265
    %v267 = vrot.slane %v266, 2
    %v268 = vmax.f32 %v266, %v267
    %v269 = vrot.slane %v268, 1
    %v270 = vmax.f32 %v268, %v269
    %v279 = vrot.slane %v228, 4
    %v280 = vrot.slane %v242, 4
    %v281 = vrot.slane %v256, 4
    %v282 = vrot.slane %v270, 4
    %v283 = vsel %vm107, %v221, %v279
    %v284 = vsel %vm107, %v235, %v280
    %v285 = vsel %vm107, %v249, %v281
    %v286 = vsel %vm107, %v263, %v282
    %v291 = vsub.f32 %v76, %v283
    %v292 = vsub.f32 %v77, %v284
    %v293 = vsub.f32 %v78, %v285
    %v294 = vsub.f32 %v79, %v286
    %v295 = vmul.f32 %v184, 1.442695
    %v296 = vpow.pop %v295
    %v297 = vmul.f32 %v185, 1.442695
    %v298 = vpow.pop %v297
    %v299 = vmul.f32 %v186, 1.442695
    %v300 = vpow.pop %v299
    %v301 = vmul.f32 %v187, 1.442695
    %v302 = vpow.pop %v301
    %307 = vst [vmem:[#allocation1] ss:$2 sm:$0xff] %v296
    %v308 = vld.sshfl [vmem:[#allocation1] sm:$0xff pattern:$0x75316420]
    %v309 = vld.sshfl [vmem:[#allocation1 + $0x8] sm:$0xff pattern:$0x75316420]
    %s310 = scalar_lea.vmem [#allocation1], 16
    %311 = vst [vmem:[%s310] ss:$2 sm:$0xff] %v298
    %v312 = vld.sshfl [vmem:[#allocation1 + $0x10] sm:$0xff pattern:$0x75316420]
    %v313 = vld.sshfl [vmem:[#allocation1 + $0x18] sm:$0xff pattern:$0x75316420]
    %s314 = scalar_lea.vmem [#allocation1], 32
    %315 = vst [vmem:[%s314] ss:$2 sm:$0xff] %v300
    %v316 = vld.sshfl [vmem:[#allocation1 + $0x20] sm:$0xff pattern:$0x75316420]
    %v317 = vld.sshfl [vmem:[#allocation1 + $0x28] sm:$0xff pattern:$0x75316420]
    %s318 = scalar_lea.vmem [#allocation1], 48
    %319 = vst [vmem:[%s318] ss:$2 sm:$0xff] %v302
    %v320 = vld.sshfl [vmem:[#allocation1 + $0x30] sm:$0xff pattern:$0x75316420]
    %v321 = vld.sshfl [vmem:[#allocation1 + $0x38] sm:$0xff pattern:$0x75316420]
    %v330 = vsel %vm107, %v308, 0.0
    %v331 = vrot.slane %v330, 4
    %v332 = vadd.f32 %v330, %v331
    %v333 = vrot.slane %v332, 2
    %v334 = vadd.f32 %v332, %v333
    %v335 = vrot.slane %v334, 1
    %v336 = vadd.f32 %v334, %v335
    %v337 = vsel %vm107, %v309, 0.0
    %v338 = vrot.slane %v337, 4
    %v339 = vadd.f32 %v337, %v338
    %v340 = vrot.slane %v339, 2
    %v341 = vadd.f32 %v339, %v340
    %v342 = vrot.slane %v341, 1
    %v343 = vadd.f32 %v341, %v342
    %v344 = vsel %vm107, %v312, 0.0
    %v345 = vrot.slane %v344, 4
    %v346 = vadd.f32 %v344, %v345
    %v347 = vrot.slane %v346, 2
    %v348 = vadd.f32 %v346, %v347
    %v349 = vrot.slane %v348, 1
    %v350 = vadd.f32 %v348, %v349
    %v351 = vsel %vm107, %v313, 0.0
    %v352 = vrot.slane %v351, 4
    %v353 = vadd.f32 %v351, %v352
    %v354 = vrot.slane %v353, 2
    %v355 = vadd.f32 %v353, %v354
    %v356 = vrot.slane %v355, 1
    %v357 = vadd.f32 %v355, %v356
    %v358 = vsel %vm107, %v316, 0.0
    %v359 = vrot.slane %v358, 4
    %v360 = vadd.f32 %v358, %v359
    %v361 = vrot.slane %v360, 2
    %v362 = vadd.f32 %v360, %v361
    %v363 = vrot.slane %v362, 1
    %v364 = vadd.f32 %v362, %v363
    %v365 = vsel %vm107, %v317, 0.0
    %v366 = vrot.slane %v365, 4
    %v367 = vadd.f32 %v365, %v366
    %v368 = vrot.slane %v367, 2
    %v369 = vadd.f32 %v367, %v368
    %v370 = vrot.slane %v369, 1
    %v371 = vadd.f32 %v369, %v370
    %v372 = vsel %vm107, %v320, 0.0
    %v373 = vrot.slane %v372, 4
    %v374 = vadd.f32 %v372, %v373
    %v375 = vrot.slane %v374, 2
    %v376 = vadd.f32 %v374, %v375
    %v377 = vrot.slane %v376, 1
    %v378 = vadd.f32 %v376, %v377
    %v379 = vsel %vm107, %v321, 0.0
    %v380 = vrot.slane %v379, 4
    %v381 = vadd.f32 %v379, %v380
    %v382 = vrot.slane %v381, 2
    %v383 = vadd.f32 %v381, %v382
    %v384 = vrot.slane %v383, 1
    %v385 = vadd.f32 %v383, %v384
    %v386 = vmul.f32 %v291, 1.442695
    %v387 = vpow.pop %v386
    %v388 = vmul.f32 %v292, 1.442695
    %v389 = vpow.pop %v388
    %v390 = vmul.f32 %v293, 1.442695
    %v391 = vpow.pop %v390
    %v392 = vmul.f32 %v294, 1.442695
    %v393 = vpow.pop %v392
    %398 = vst [vmem:[#allocation1] ss:$2 sm:$0xff] %v387
    %v399 = vld.sshfl [vmem:[#allocation1] sm:$0xff pattern:$0x75316420]
    %v400 = vld.sshfl [vmem:[#allocation1 + $0x8] sm:$0xff pattern:$0x75316420]
    %s401 = scalar_lea.vmem [#allocation1], 16
    %402 = vst [vmem:[%s401] ss:$2 sm:$0xff] %v389
    %v403 = vld.sshfl [vmem:[#allocation1 + $0x10] sm:$0xff pattern:$0x75316420]
    %v404 = vld.sshfl [vmem:[#allocation1 + $0x18] sm:$0xff pattern:$0x75316420]
    %s405 = scalar_lea.vmem [#allocation1], 32
    %406 = vst [vmem:[%s405] ss:$2 sm:$0xff] %v391
    %v407 = vld.sshfl [vmem:[#allocation1 + $0x20] sm:$0xff pattern:$0x75316420]
    %v408 = vld.sshfl [vmem:[#allocation1 + $0x28] sm:$0xff pattern:$0x75316420]
    %s409 = scalar_lea.vmem [#allocation1], 48
    %410 = vst [vmem:[%s409] ss:$2 sm:$0xff] %v393
    %v411 = vld.sshfl [vmem:[#allocation1 + $0x30] sm:$0xff pattern:$0x75316420]
    %v412 = vld.sshfl [vmem:[#allocation1 + $0x38] sm:$0xff pattern:$0x75316420]
    %v421 = vsel %vm107, %v399, 0.0
    %v422 = vrot.slane %v421, 4
    %v423 = vadd.f32 %v421, %v422
    %v424 = vrot.slane %v423, 2
    %v425 = vadd.f32 %v423, %v424
    %v426 = vrot.slane %v425, 1
    %v427 = vadd.f32 %v425, %v426
    %v428 = vsel %vm107, %v400, 0.0
    %v429 = vrot.slane %v428, 4
    %v430 = vadd.f32 %v428, %v429
    %v431 = vrot.slane %v430, 2
    %v432 = vadd.f32 %v430, %v431
    %v433 = vrot.slane %v432, 1
    %v434 = vadd.f32 %v432, %v433
    %v435 = vsel %vm107, %v403, 0.0
    %v436 = vrot.slane %v435, 4
    %v437 = vadd.f32 %v435, %v436
    %v438 = vrot.slane %v437, 2
    %v439 = vadd.f32 %v437, %v438
    %v440 = vrot.slane %v439, 1
    %v441 = vadd.f32 %v439, %v440
    %v442 = vsel %vm107, %v404, 0.0
    %v443 = vrot.slane %v442, 4
    %v444 = vadd.f32 %v442, %v443
    %v445 = vrot.slane %v444, 2
    %v446 = vadd.f32 %v444, %v445
    %v447 = vrot.slane %v446, 1
    %v448 = vadd.f32 %v446, %v447
    %v449 = vsel %vm107, %v407, 0.0
    %v450 = vrot.slane %v449, 4
    %v451 = vadd.f32 %v449, %v450
    %v452 = vrot.slane %v451, 2
    %v453 = vadd.f32 %v451, %v452
    %v454 = vrot.slane %v453, 1
    %v455 = vadd.f32 %v453, %v454
    %v456 = vsel %vm107, %v408, 0.0
    %v457 = vrot.slane %v456, 4
    %v458 = vadd.f32 %v456, %v457
    %v459 = vrot.slane %v458, 2
    %v460 = vadd.f32 %v458, %v459
    %v461 = vrot.slane %v460, 1
    %v462 = vadd.f32 %v460, %v461
    %v463 = vsel %vm107, %v411, 0.0
    %v464 = vrot.slane %v463, 4
    %v465 = vadd.f32 %v463, %v464
    %v466 = vrot.slane %v465, 2
    %v467 = vadd.f32 %v465, %v466
    %v468 = vrot.slane %v467, 1
    %v469 = vadd.f32 %v467, %v468
    %v470 = vsel %vm107, %v412, 0.0
    %v471 = vrot.slane %v470, 4
    %v472 = vadd.f32 %v470, %v471
    %v473 = vrot.slane %v472, 2
    %v474 = vadd.f32 %v472, %v473
    %v475 = vrot.slane %v474, 1
    %v476 = vadd.f32 %v474, %v475
    %v477 = vsub.f32 %v291, %v184
    %v478 = vsub.f32 %v292, %v185
    %v479 = vsub.f32 %v293, %v186
    %v480 = vsub.f32 %v294, %v187
    %v481 = vmul.f32 %v387, %v477
    %v482 = vmul.f32 %v389, %v478
    %v483 = vmul.f32 %v391, %v479
    %v484 = vmul.f32 %v393, %v480
    %489 = vst [vmem:[#allocation1] ss:$2 sm:$0xff] %v481
    %v490 = vld.sshfl [vmem:[#allocation1] sm:$0xff pattern:$0x75316420]
    %v491 = vld.sshfl [vmem:[#allocation1 + $0x8] sm:$0xff pattern:$0x75316420]
    %s492 = scalar_lea.vmem [#allocation1], 16
    %493 = vst [vmem:[%s492] ss:$2 sm:$0xff] %v482
    %v494 = vld.sshfl [vmem:[#allocation1 + $0x10] sm:$0xff pattern:$0x75316420]
    %v495 = vld.sshfl [vmem:[#allocation1 + $0x18] sm:$0xff pattern:$0x75316420]
    %s496 = scalar_lea.vmem [#allocation1], 32
    %497 = vst [vmem:[%s496] ss:$2 sm:$0xff] %v483
    %v498 = vld.sshfl [vmem:[#allocation1 + $0x20] sm:$0xff pattern:$0x75316420]
    %v499 = vld.sshfl [vmem:[#allocation1 + $0x28] sm:$0xff pattern:$0x75316420]
    %s500 = scalar_lea.vmem [#allocation1], 48
    %501 = vst [vmem:[%s500] ss:$2 sm:$0xff] %v484
    %v502 = vld.sshfl [vmem:[#allocation1 + $0x30] sm:$0xff pattern:$0x75316420]
    %v503 = vld.sshfl [vmem:[#allocation1 + $0x38] sm:$0xff pattern:$0x75316420]
    %v512 = vsel %vm107, %v490, 0.0
    %v513 = vrot.slane %v512, 4
    %v514 = vadd.f32 %v512, %v513
    %v515 = vrot.slane %v514, 2
    %v516 = vadd.f32 %v514, %v515
    %v517 = vrot.slane %v516, 1
    %v518 = vadd.f32 %v516, %v517
    %v519 = vsel %vm107, %v491, 0.0
    %v520 = vrot.slane %v519, 4
    %v521 = vadd.f32 %v519, %v520
    %v522 = vrot.slane %v521, 2
    %v523 = vadd.f32 %v521, %v522
    %v524 = vrot.slane %v523, 1
    %v525 = vadd.f32 %v523, %v524
    %v526 = vsel %vm107, %v494, 0.0
    %v527 = vrot.slane %v526, 4
    %v528 = vadd.f32 %v526, %v527
    %v529 = vrot.slane %v528, 2
    %v530 = vadd.f32 %v528, %v529
    %v531 = vrot.slane %v530, 1
    %v532 = vadd.f32 %v530, %v531
    %v533 = vsel %vm107, %v495, 0.0
    %v534 = vrot.slane %v533, 4
    %v535 = vadd.f32 %v533, %v534
    %v536 = vrot.slane %v535, 2
    %v537 = vadd.f32 %v535, %v536
    %v538 = vrot.slane %v537, 1
    %v539 = vadd.f32 %v537, %v538
    %v540 = vsel %vm107, %v498, 0.0
    %v541 = vrot.slane %v540, 4
    %v542 = vadd.f32 %v540, %v541
    %v543 = vrot.slane %v542, 2
    %v544 = vadd.f32 %v542, %v543
    %v545 = vrot.slane %v544, 1
    %v546 = vadd.f32 %v544, %v545
    %v547 = vsel %vm107, %v499, 0.0
    %v548 = vrot.slane %v547, 4
    %v549 = vadd.f32 %v547, %v548
    %v550 = vrot.slane %v549, 2
    %v551 = vadd.f32 %v549, %v550
    %v552 = vrot.slane %v551, 1
    %v553 = vadd.f32 %v551, %v552
    %v554 = vsel %vm107, %v502, 0.0
    %v555 = vrot.slane %v554, 4
    %v556 = vadd.f32 %v554, %v555
    %v557 = vrot.slane %v556, 2
    %v558 = vadd.f32 %v556, %v557
    %v559 = vrot.slane %v558, 1
    %v560 = vadd.f32 %v558, %v559
    %v561 = vsel %vm107, %v503, 0.0
    %v562 = vrot.slane %v561, 4
    %v563 = vadd.f32 %v561, %v562
    %v564 = vrot.slane %v563, 2
    %v565 = vadd.f32 %v563, %v564
    %v566 = vrot.slane %v565, 1
    %v567 = vadd.f32 %v565, %v566
    %v568 = vrcp.pop %v427
    %v569 = vmul.f32 %v427, %v568
    %v570 = vsub.f32 1.0, %v569
    %v571 = vmul.f32 %v568, %v570
    %v572 = vadd.f32 %v568, %v571
    %vm573 = vweird.f32 %v427
    %vm574 = vweird.f32 %v568
    %vm575 = vmor %vm573, %vm574
    %v576 = vsel %vm575, %v568, %v572
    %v577 = vand.u32 2147483647, %v427
    %vm578 = vcmp.eq.f32.partialorder %v577, 8.507059e+37
    %v579 = vand.u32 %v427, 2147483648
    %v580 = vor.u32 1.1754944e-38, %v579
    %v581 = vsel %vm578, %v580, %v576
    %v582 = vmul.f32 %v518, %v581
    %v583 = vrcp.pop %v434
    %v584 = vmul.f32 %v434, %v583
    %v585 = vsub.f32 1.0, %v584
    %v586 = vmul.f32 %v583, %v585
    %v587 = vadd.f32 %v583, %v586
    %vm588 = vweird.f32 %v434
    %vm589 = vweird.f32 %v583
    %vm590 = vmor %vm588, %vm589
    %v591 = vsel %vm590, %v583, %v587
    %v592 = vand.u32 2147483647, %v434
    %vm593 = vcmp.eq.f32.partialorder %v592, 8.507059e+37
    %v594 = vand.u32 %v434, 2147483648
    %v595 = vor.u32 1.1754944e-38, %v594
    %v596 = vsel %vm593, %v595, %v591
    %v597 = vmul.f32 %v525, %v596
    %v598 = vrcp.pop %v441
    %v599 = vmul.f32 %v441, %v598
    %v600 = vsub.f32 1.0, %v599
    %v601 = vmul.f32 %v598, %v600
    %v602 = vadd.f32 %v598, %v601
    %vm603 = vweird.f32 %v441
    %vm604 = vweird.f32 %v598
    %vm605 = vmor %vm603, %vm604
    %v606 = vsel %vm605, %v598, %v602
    %v607 = vand.u32 2147483647, %v441
    %vm608 = vcmp.eq.f32.partialorder %v607, 8.507059e+37
    %v609 = vand.u32 %v441, 2147483648
    %v610 = vor.u32 1.1754944e-38, %v609
    %v611 = vsel %vm608, %v610, %v606
    %v612 = vmul.f32 %v532, %v611
    %v613 = vrcp.pop %v448
    %v614 = vmul.f32 %v448, %v613
    %v615 = vsub.f32 1.0, %v614
    %v616 = vmul.f32 %v613, %v615
    %v617 = vadd.f32 %v613, %v616
    %vm618 = vweird.f32 %v448
    %vm619 = vweird.f32 %v613
    %vm620 = vmor %vm618, %vm619
    %v621 = vsel %vm620, %v613, %v617
    %v622 = vand.u32 2147483647, %v448
    %vm623 = vcmp.eq.f32.partialorder %v622, 8.507059e+37
    %v624 = vand.u32 %v448, 2147483648
    %v625 = vor.u32 1.1754944e-38, %v624
    %v626 = vsel %vm623, %v625, %v621
    %v627 = vmul.f32 %v539, %v626
    %v628 = vrcp.pop %v455
    %v629 = vmul.f32 %v455, %v628
    %v630 = vsub.f32 1.0, %v629
    %v631 = vmul.f32 %v628, %v630
    %v632 = vadd.f32 %v628, %v631
    %vm633 = vweird.f32 %v455
    %vm634 = vweird.f32 %v628
    %vm635 = vmor %vm633, %vm634
    %v636 = vsel %vm635, %v628, %v632
    %v637 = vand.u32 2147483647, %v455
    %vm638 = vcmp.eq.f32.partialorder %v637, 8.507059e+37
    %v639 = vand.u32 %v455, 2147483648
    %v640 = vor.u32 1.1754944e-38, %v639
    %v641 = vsel %vm638, %v640, %v636
    %v642 = vmul.f32 %v546, %v641
    %v643 = vrcp.pop %v462
    %v644 = vmul.f32 %v462, %v643
    %v645 = vsub.f32 1.0, %v644
    %v646 = vmul.f32 %v643, %v645
    %v647 = vadd.f32 %v643, %v646
    %vm648 = vweird.f32 %v462
    %vm649 = vweird.f32 %v643
    %vm650 = vmor %vm648, %vm649
    %v651 = vsel %vm650, %v643, %v647
    %v652 = vand.u32 2147483647, %v462
    %vm653 = vcmp.eq.f32.partialorder %v652, 8.507059e+37
    %v654 = vand.u32 %v462, 2147483648
    %v655 = vor.u32 1.1754944e-38, %v654
    %v656 = vsel %vm653, %v655, %v651
    %v657 = vmul.f32 %v553, %v656
    %v658 = vrcp.pop %v469
    %v659 = vmul.f32 %v469, %v658
    %v660 = vsub.f32 1.0, %v659
    %v661 = vmul.f32 %v658, %v660
    %v662 = vadd.f32 %v658, %v661
    %vm663 = vweird.f32 %v469
    %vm664 = vweird.f32 %v658
    %vm665 = vmor %vm663, %vm664
    %v666 = vsel %vm665, %v658, %v662
    %v667 = vand.u32 2147483647, %v469
    %vm668 = vcmp.eq.f32.partialorder %v667, 8.507059e+37
    %v669 = vand.u32 %v469, 2147483648
    %v670 = vor.u32 1.1754944e-38, %v669
    %v671 = vsel %vm668, %v670, %v666
    %v672 = vmul.f32 %v560, %v671
    %v673 = vrcp.pop %v476
    %v674 = vmul.f32 %v476, %v673
    %v675 = vsub.f32 1.0, %v674
    %v676 = vmul.f32 %v673, %v675
    %v677 = vadd.f32 %v673, %v676
    %vm678 = vweird.f32 %v476
    %vm679 = vweird.f32 %v673
    %vm680 = vmor %vm678, %vm679
    %v681 = vsel %vm680, %v673, %v677
    %v682 = vand.u32 2147483647, %v476
    %vm683 = vcmp.eq.f32.partialorder %v682, 8.507059e+37
    %v684 = vand.u32 %v476, 2147483648
    %v685 = vor.u32 1.1754944e-38, %v684
    %v686 = vsel %vm683, %v685, %v681
    %v687 = vmul.f32 %v567, %v686
    %v688 = vlog2.pop %v336
    %v689 = vmul.f32 %v688, 0.6931472
    %v690 = vlog2.pop %v343
    %v691 = vmul.f32 %v690, 0.6931472
    %v692 = vlog2.pop %v350
    %v693 = vmul.f32 %v692, 0.6931472
    %v694 = vlog2.pop %v357
    %v695 = vmul.f32 %v694, 0.6931472
    %v696 = vlog2.pop %v364
    %v697 = vmul.f32 %v696, 0.6931472
    %v698 = vlog2.pop %v371
    %v699 = vmul.f32 %v698, 0.6931472
    %v700 = vlog2.pop %v378
    %v701 = vmul.f32 %v700, 0.6931472
    %v702 = vlog2.pop %v385
    %v703 = vmul.f32 %v702, 0.6931472
    %v704 = vlog2.pop %v427
    %v705 = vmul.f32 %v704, 0.6931472
    %v706 = vlog2.pop %v434
    %v707 = vmul.f32 %v706, 0.6931472
    %v708 = vlog2.pop %v441
    %v709 = vmul.f32 %v708, 0.6931472
    %v710 = vlog2.pop %v448
    %v711 = vmul.f32 %v710, 0.6931472
    %v712 = vlog2.pop %v455
    %v713 = vmul.f32 %v712, 0.6931472
    %v714 = vlog2.pop %v462
    %v715 = vmul.f32 %v714, 0.6931472
    %v716 = vlog2.pop %v469
    %v717 = vmul.f32 %v716, 0.6931472
    %v718 = vlog2.pop %v476
    %v719 = vmul.f32 %v718, 0.6931472
    %v720 = vsub.f32 %v689, %v705
    %v721 = vsub.f32 %v691, %v707
    %v722 = vsub.f32 %v693, %v709
    %v723 = vsub.f32 %v695, %v711
    %v724 = vsub.f32 %v697, %v713
    %v725 = vsub.f32 %v699, %v715
    %v726 = vsub.f32 %v701, %v717
    %v727 = vsub.f32 %v703, %v719
    %v728 = vadd.f32 %v582, %v720
    %v729 = vadd.f32 %v597, %v721
    %v730 = vadd.f32 %v612, %v722
    %v731 = vadd.f32 %v627, %v723
    %v732 = vadd.f32 %v642, %v724
    %v733 = vadd.f32 %v657, %v725
    %v734 = vadd.f32 %v672, %v726
    %v735 = vadd.f32 %v687, %v727
    %v736 = vadd.f32 %v728, %v729
    %737 = vadd.xlane.f32.xlu0 %v736
    %v738 = vpop.xlane.xlu0 %737
    %v739 = vadd.f32 %v730, %v731
    %740 = vadd.xlane.f32.xlu0 %v739
    %v741 = vpop.xlane.xlu0 %740
    %v742 = vadd.f32 %v732, %v733
    %743 = vadd.xlane.f32.xlu0 %v742
    %v744 = vpop.xlane.xlu0 %743
    %v745 = vadd.f32 %v734, %v735
    %746 = vadd.xlane.f32.xlu0 %v745
    %v747 = vpop.xlane.xlu0 %746
    %v748 = vld [vmem:[%s2] sm:$0x1]
    %v749 = vld [vmem:[%s2 + $0x1] sm:$0x1]
    %v750 = vld [vmem:[%s2 + $0x2] sm:$0x1]
    %v751 = vld [vmem:[%s2 + $0x3] sm:$0x1]
    %v752 = vadd.f32 %v748, %v738
    %v753 = vadd.f32 %v749, %v741
    %v754 = vadd.f32 %v750, %v744
    %v755 = vadd.f32 %v751, %v747
    %vm756 = vcmask 0
    %757 = vst.msk [vmem:[%s2] sm:$0x1] %vm756, %v752
    %758 = vst.msk [vmem:[%s2 + $0x1] sm:$0x1] %vm756, %v753
    %759 = vst.msk [vmem:[%s2 + $0x2] sm:$0x1] %vm756, %v754
    %760 = vst.msk [vmem:[%s2 + $0x3] sm:$0x1] %vm756, %v755
    // Predicated region
    $region22: #{tpu_custom_call.1} parent=1 // pred_check
      _
    $region23: #{tpu_custom_call.1} parent=1 // pred_check_branch
      %762 = sbr.rel (0) target = $region25
    $region24: #{tpu_custom_call.1} parent=1 // pred_region
      _
    $region25: #{tpu_custom_call.1} parent=1 // pred_fallthru
      _
    // Predicated region
    $region26: #{tpu_custom_call.1} parent=1 // pred_check
      _
    $region27: #{tpu_custom_call.1} parent=1 // pred_check_branch
      %764 = sbr.rel (0) target = $region29
    $region28: #{tpu_custom_call.1} parent=1 // pred_region
      _
    $region29: #{tpu_custom_call.1} parent=1 // pred_fallthru
      _
    %765 = vsyncpa [#allocation3], 1
    %766 = vsyncpa [#allocation5], 1

</llo_original>
